<compile_context>
chip_gen: v7x
topology: tpu7x:2x2x1
jax: 0.10.0
libtpu: 0.0.40
codegen_flags: <defaults>
</compile_context>

<pallas_src>
import jax
import jax.numpy as jnp
from jax.experimental import pallas as pl
from jax.experimental.pallas import tpu as pltpu

V = 1            # num_embeddings
E = 28 * 28      # embedding dim (784)
H = 32           # MLP hidden width
O = 10           # MLP output width
HP = 128         # lane-dense padded hidden width
OP = 128         # lane-dense padded output width
EA = E + 1       # embedding row + trailing 1.0 (bias lane)


def deepdream_kernel(emb_ref, w1_ref, w2_ref, e_ref, o_ref):
    # emb_ref: (1, EA)   -- embedding row 0 with a trailing 1.0 bias lane.
    # w1_ref : (EA, HP)  -- [[w1],[b1]] with column H a one-hot picking the bias
    #                       lane (so h[:, H] == 1 survives the ReLU); rest zero.
    # w2_ref : (HP, OP)  -- [[w2],[b2],[0]] zero-padded to lane-dense widths.
    x = emb_ref[...]                                                   # (1, EA)

    h = jnp.dot(x, w1_ref[...], preferred_element_type=jnp.float32)   # (1, HP)
    h = jnp.maximum(h, 0.0)                                            # ReLU(1)=1
    o = jnp.dot(h, w2_ref[...], preferred_element_type=jnp.float32)   # (1, OP)

    B = e_ref.shape[0]
    # V == 1: every valid index maps to row 0, so the "gather" is a broadcast.
    e_ref[...] = jnp.broadcast_to(x[:, :E], (B, E)).astype(e_ref.dtype)
    o_ref[...] = jnp.broadcast_to(o, (B, OP)).astype(o_ref.dtype)


def _pack_params(emb, w1, b1, w2, b2):
    """Host-side: fold biases into the weights and pad to lane-dense widths."""
    emb_aug = jnp.concatenate(
        [emb.astype(jnp.float32), jnp.ones((1, 1), jnp.float32)], axis=1)  # (1, EA)

    w1p = jnp.zeros((EA, HP), jnp.float32)
    w1p = w1p.at[:E, :H].set(w1.astype(jnp.float32))
    w1p = w1p.at[E, :H].set(b1.astype(jnp.float32))
    w1p = w1p.at[E, H].set(1.0)          # bias-carrier lane: h[:, H] == 1

    w2p = jnp.zeros((HP, OP), jnp.float32)
    w2p = w2p.at[:H, :O].set(w2.astype(jnp.float32))
    w2p = w2p.at[H, :O].set(b2.astype(jnp.float32))
    return emb_aug, w1p, w2p


def deepdream_forward(idx, emb, w1, b1, w2, b2):
    """idx: (B,) int of embedding indices (V == 1, so only 0 is valid).
    Returns (e, o) like the PyTorch module: e (B, 784), o (B, 10).

    NOTE: the broadcast-instead-of-gather optimization is only valid while the
    embedding table has a single row (V == 1); guarded by the assert below.
    """
    assert emb.shape == (V, E) and V == 1
    B = idx.shape[0]
    emb_aug, w1p, w2p = _pack_params(emb, w1, b1, w2, b2)

    vmem = pl.BlockSpec(memory_space=pltpu.MemorySpace.VMEM)
    e_out, o_pad = pl.pallas_call(
        deepdream_kernel,
        out_shape=(jax.ShapeDtypeStruct((B, E), jnp.float32),
                   jax.ShapeDtypeStruct((B, OP), jnp.float32)),
        in_specs=[vmem, vmem, vmem],
        out_specs=(vmem, vmem),
    )(emb_aug, w1p, w2p)
    return e_out, o_pad[:, :O]


def reference_forward(idx, emb, w1, b1, w2, b2):
    e = jnp.take(emb, idx, axis=0)                    # nn.Embedding lookup
    h = jnp.maximum(e @ w1 + b1, 0.0)
    o = h @ w2 + b2
    return e, o


if __name__ == "__main__":
    key = jax.random.PRNGKey(0)
    k_emb, k_w1, k_b1, k_w2, k_b2 = jax.random.split(key, 5)

    # embedding.weight = inputs[0].reshape(1, 784) -> synthetic deterministic image
    emb = jax.random.normal(k_emb, (V, E), dtype=jnp.float32)
    w1 = jax.random.normal(k_w1, (E, H), dtype=jnp.float32) * 0.05
    b1 = jax.random.normal(k_b1, (H,), dtype=jnp.float32) * 0.05
    w2 = jax.random.normal(k_w2, (H, O), dtype=jnp.float32) * 0.05
    b2 = jax.random.normal(k_b2, (O,), dtype=jnp.float32) * 0.05

    # batch of 2 lookups; the only valid index for a 1-row embedding is 0.
    idx = jnp.zeros((2,), dtype=jnp.int32)

    e_out, o_out = deepdream_forward(idx, emb, w1, b1, w2, b2)
    jax.block_until_ready((e_out, o_out))

    e_ref, o_ref = reference_forward(idx, emb, w1, b1, w2, b2)
    assert e_out.shape == (2, E) and o_out.shape == (2, O)
    assert jnp.allclose(e_out, e_ref, atol=1e-5, rtol=1e-5)
    assert jnp.allclose(o_out, o_ref, atol=1e-4, rtol=1e-4)

    print("KERNEL_OK")
</pallas_src>

<mosaic_0001>
module attributes {stable_mosaic.version = 11 : i64} {
  func.func @deepdream_kernel(%arg0: memref<1x785xf32, #tpu.memory_space<vmem>>, %arg1: memref<785x128xf32, #tpu.memory_space<vmem>>, %arg2: memref<128x128xf32, #tpu.memory_space<vmem>>, %arg3: memref<2x784xf32, #tpu.memory_space<vmem>>, %arg4: memref<2x128xf32, #tpu.memory_space<vmem>>) attributes {dimension_semantics = [], scalar_prefetch = 0 : i64, scratch_operands = 0 : i64, tpu.core_type = #tpu.core_type<tc>} {
    %c0 = arith.constant 0 : index
    %c0_0 = arith.constant 0 : index
    %0 = vector.load %arg0[%c0, %c0_0] : memref<1x785xf32, #tpu.memory_space<vmem>>, vector<1x785xf32>
    %c0_1 = arith.constant 0 : index
    %c0_2 = arith.constant 0 : index
    %1 = vector.load %arg1[%c0_1, %c0_2] : memref<785x128xf32, #tpu.memory_space<vmem>>, vector<785x128xf32>
    %cst = arith.constant dense<0.000000e+00> : vector<1x128xf32>
    %2 = tpu.matmul %0, %1, %cst {dimension_numbers = #tpu.dot_dimension_numbers<[1], [0], [0], [1], [0, 0, 1, 1], [], []>} : vector<1x785xf32>, vector<785x128xf32>, vector<1x128xf32> -> vector<1x128xf32>
    %cst_3 = arith.constant 0.000000e+00 : f32
    %3 = vector.broadcast %cst_3 : f32 to vector<1x128xf32>
    %4 = arith.maximumf %2, %3 : vector<1x128xf32>
    %c0_4 = arith.constant 0 : index
    %c0_5 = arith.constant 0 : index
    %5 = vector.load %arg2[%c0_4, %c0_5] : memref<128x128xf32, #tpu.memory_space<vmem>>, vector<128x128xf32>
    %cst_6 = arith.constant dense<0.000000e+00> : vector<1x128xf32>
    %6 = tpu.matmul %4, %5, %cst_6 {dimension_numbers = #tpu.dot_dimension_numbers<[1], [0], [0], [1], [0, 0, 1, 1], [], []>} : vector<1x128xf32>, vector<128x128xf32>, vector<1x128xf32> -> vector<1x128xf32>
    %7 = vector.extract_strided_slice %0 {offsets = [0, 0], sizes = [1, 784], strides = [1, 1]} : vector<1x785xf32> to vector<1x784xf32>
    %8 = vector.shape_cast %7 : vector<1x784xf32> to vector<1x784xf32>
    %9 = vector.broadcast %8 : vector<1x784xf32> to vector<2x784xf32>
    %c0_7 = arith.constant 0 : index
    %c0_8 = arith.constant 0 : index
    %10 = vector.load %arg3[%c0_7, %c0_8] : memref<2x784xf32, #tpu.memory_space<vmem>>, vector<2x784xf32>
    tpu.vector_store %arg3[%c0_7, %c0_8], %9 {strides = array<i32>} : memref<2x784xf32, #tpu.memory_space<vmem>>, vector<2x784xf32>,
    %11 = vector.shape_cast %6 : vector<1x128xf32> to vector<1x128xf32>
    %12 = vector.broadcast %11 : vector<1x128xf32> to vector<2x128xf32>
    %c0_9 = arith.constant 0 : index
    %c0_10 = arith.constant 0 : index
    %13 = vector.load %arg4[%c0_9, %c0_10] : memref<2x128xf32, #tpu.memory_space<vmem>>, vector<2x128xf32>
    tpu.vector_store %arg4[%c0_9, %c0_10], %12 {strides = array<i32>} : memref<2x128xf32, #tpu.memory_space<vmem>>, vector<2x128xf32>,
    return
  }
}

</mosaic_0001>

<llo_original>
// kernel: tpu_custom_call.1
$region0: #{tpu_custom_call.1}
  #allocation0 [shape = 'u32[]', space=smem, size = 0x4, offset = 0x4, fixed_abs, tag = 'smem constant byte address 0x4 - core index']
  #allocation1 [shape = 'u32[144,128]{1,0:T(1,128)}', space=vmem, size = 0x12000, scoped, tag = 'internal scratch']
  %s0 = inlined_call_operand.hbm [shape: f32[1,785], index: 0, kind: input, shape index: {}]
  %s1 = inlined_call_operand.hbm [shape: f32[785,128], index: 1, kind: input, shape index: {}]
  %s2 = inlined_call_operand.hbm [shape: f32[128,128], index: 2, kind: input, shape index: {}]
  %s3 = inlined_call_operand.hbm [shape: f32[2,784], index: 3, kind: output, shape index: {0}]
  %s4 = inlined_call_operand.hbm [shape: f32[2,128], index: 4, kind: output, shape index: {1}]
  %5 = xla_tuple %s3, %s4
  %s6 = sld [smem:[#allocation0]]
  $region42: #{tpu_custom_call.1} parent=0
    _
  %s8 = ssub.s32 1, %s6
  %s9 = scalar_select 0, %s8, %s6
  $region1: #{tpu_custom_call.1} parent=0
    #allocation2 [shape = 'u8[3584]{0}', space=vmem, size = 0x1000, scoped, tag = 'input window, operand 0, single buffered']
    #allocation3 [shape = 's32[1]{0}', space=sflag, size = 0x4, scoped, tag = 'scoped memory for tpu_custom_call.1']
    #allocation4 [shape = 's32[1]{0}', space=sflag, size = 0x4, scoped, tag = 'scoped memory for tpu_custom_call.1']
    #allocation5 [shape = 'u8[405504]{0}', space=vmem, size = 0x63000, scoped, tag = 'input window, operand 1, single buffered']
    #allocation6 [shape = 's32[1]{0}', space=sflag, size = 0x4, scoped, tag = 'scoped memory for tpu_custom_call.1']
    #allocation7 [shape = 'u8[65536]{0}', space=vmem, size = 0x10000, scoped, tag = 'input window, operand 2, single buffered']
    #allocation8 [shape = 'u8[7168]{0}', space=vmem, size = 0x1c00, scoped, tag = 'output window, operand 0, single buffered']
    #allocation9 [shape = 'u8[1024]{0}', space=vmem, size = 0x400, scoped, tag = 'output window, operand 1, single buffered']
    #allocation10 [shape = 's32[1]{0}', space=sflag, size = 0x4, scoped, tag = 'scoped memory for tpu_custom_call.1']
    %10 = vsyncpa [#allocation3], 0
    %11 = vsyncpa [#allocation6], 0
    %12 = vsyncpa [#allocation4], 0
    %13 = vsyncpa [#allocation10], 0
    // Predicated region
    $region2: #{tpu_custom_call.1} parent=1 // pred_check
      _
    $region3: #{tpu_custom_call.1} parent=1 // pred_check_branch
      %15 = sbr.rel (0) target = $region5
    $region4: #{tpu_custom_call.1} parent=1 // pred_region
      %s17 = ssub.s32 112, 112
      %18 = vsyncadd [#allocation3], %s17
      %s20 = sshll.u32 [#allocation2], 4
      %s21 = int_to_ptr.vmem [resolvable:$true] %s20
      %23 = dma.hbm_to_vmem [thread:$0]  %s0, 112, %s21, [#allocation3]
    $region5: #{tpu_custom_call.1} parent=1 // pred_fallthru
      _
    // Predicated region
    $region6: #{tpu_custom_call.1} parent=1 // pred_check
      _
    $region7: #{tpu_custom_call.1} parent=1 // pred_check_branch
      %25 = sbr.rel (0) target = $region9
    $region8: #{tpu_custom_call.1} parent=1 // pred_region
      %s27 = ssub.s32 12672, 12672
      %28 = vsyncadd [#allocation6], %s27
      %s29 = sshll.u32 [#allocation5], 4
      %s30 = int_to_ptr.vmem [resolvable:$true] %s29
      %35 = dma.hbm_to_vmem [thread:$0]  %s1, 12672, %s30, [#allocation6], 128, 128, 8
    $region9: #{tpu_custom_call.1} parent=1 // pred_fallthru
      _
    // Predicated region
    $region10: #{tpu_custom_call.1} parent=1 // pred_check
      _
    $region11: #{tpu_custom_call.1} parent=1 // pred_check_branch
      %37 = sbr.rel (0) target = $region13
    $region12: #{tpu_custom_call.1} parent=1 // pred_region
      %s39 = ssub.s32 2048, 2048
      %40 = vsyncadd [#allocation6], %s39
      %s41 = sshll.u32 [#allocation7], 4
      %s42 = int_to_ptr.vmem [resolvable:$true] %s41
      %47 = dma.hbm_to_vmem [thread:$0]  %s2, 2048, %s42, [#allocation6], 128, 128, 8
    $region13: #{tpu_custom_call.1} parent=1 // pred_fallthru
      _
    // Predicated region
    $region14: #{tpu_custom_call.1} parent=1 // pred_check
      _
    $region15: #{tpu_custom_call.1} parent=1 // pred_check_branch
      %49 = sbr.rel (0) target = $region17
    $region16: #{tpu_custom_call.1} parent=1 // pred_region
      %50 = dma.done [#allocation3], 112
    $region17: #{tpu_custom_call.1} parent=1 // pred_fallthru
      _
    // Predicated region
    $region18: #{tpu_custom_call.1} parent=1 // pred_check
      _
    $region19: #{tpu_custom_call.1} parent=1 // pred_check_branch
      %52 = sbr.rel (0) target = $region21
    $region20: #{tpu_custom_call.1} parent=1 // pred_region
      %53 = dma.done [#allocation6], 12672
    $region21: #{tpu_custom_call.1} parent=1 // pred_fallthru
      _
    // Predicated region
    $region22: #{tpu_custom_call.1} parent=1 // pred_check
      _
    $region23: #{tpu_custom_call.1} parent=1 // pred_check_branch
      %55 = sbr.rel (0) target = $region25
    $region24: #{tpu_custom_call.1} parent=1 // pred_region
      %56 = dma.done [#allocation6], 2048
    $region25: #{tpu_custom_call.1} parent=1 // pred_fallthru
      _
    %v57 = vld [vmem:[#allocation2] sm:$0x7f]
    %v58 = vld [vmem:[#allocation5] sm:$0xff]
    %v59 = vld [vmem:[#allocation5 + $0x8] sm:$0xff]
    %v60 = vld [vmem:[#allocation5 + $0x10] sm:$0xff]
    %v61 = vld [vmem:[#allocation5 + $0x18] sm:$0xff]
    %v62 = vld [vmem:[#allocation5 + $0x20] sm:$0xff]
    %v63 = vld [vmem:[#allocation5 + $0x28] sm:$0xff]
    %v64 = vld [vmem:[#allocation5 + $0x30] sm:$0xff]
    %v65 = vld [vmem:[#allocation5 + $0x38] sm:$0xff]
    %v66 = vld [vmem:[#allocation5 + $0x40] sm:$0xff]
    %v67 = vld [vmem:[#allocation5 + $0x48] sm:$0xff]
    %v68 = vld [vmem:[#allocation5 + $0x50] sm:$0xff]
    %v69 = vld [vmem:[#allocation5 + $0x58] sm:$0xff]
    %v70 = vld [vmem:[#allocation5 + $0x60] sm:$0xff]
    %v71 = vld [vmem:[#allocation5 + $0x68] sm:$0xff]
    %v72 = vld [vmem:[#allocation5 + $0x70] sm:$0xff]
    %v73 = vld [vmem:[#allocation5 + $0x78] sm:$0xff]
    %v74 = vld [vmem:[#allocation5 + $0x80] sm:$0xff]
    %v75 = vld [vmem:[#allocation5 + $0x88] sm:$0xff]
    %v76 = vld [vmem:[#allocation5 + $0x90] sm:$0xff]
    %v77 = vld [vmem:[#allocation5 + $0x98] sm:$0xff]
    %v78 = vld [vmem:[#allocation5 + $0xa0] sm:$0xff]
    %v79 = vld [vmem:[#allocation5 + $0xa8] sm:$0xff]
    %v80 = vld [vmem:[#allocation5 + $0xb0] sm:$0xff]
    %v81 = vld [vmem:[#allocation5 + $0xb8] sm:$0xff]
    %v82 = vld [vmem:[#allocation5 + $0xc0] sm:$0xff]
    %v83 = vld [vmem:[#allocation5 + $0xc8] sm:$0xff]
    %v84 = vld [vmem:[#allocation5 + $0xd0] sm:$0xff]
    %v85 = vld [vmem:[#allocation5 + $0xd8] sm:$0xff]
    %v86 = vld [vmem:[#allocation5 + $0xe0] sm:$0xff]
    %v87 = vld [vmem:[#allocation5 + $0xe8] sm:$0xff]
    %v88 = vld [vmem:[#allocation5 + $0xf0] sm:$0xff]
    %v89 = vld [vmem:[#allocation5 + $0xf8] sm:$0xff]
    %v90 = vld [vmem:[#allocation5 + $0x100] sm:$0xff]
    %v91 = vld [vmem:[#allocation5 + $0x108] sm:$0xff]
    %v92 = vld [vmem:[#allocation5 + $0x110] sm:$0xff]
    %v93 = vld [vmem:[#allocation5 + $0x118] sm:$0xff]
    %v94 = vld [vmem:[#allocation5 + $0x120] sm:$0xff]
    %v95 = vld [vmem:[#allocation5 + $0x128] sm:$0xff]
    %v96 = vld [vmem:[#allocation5 + $0x130] sm:$0xff]
    %v97 = vld [vmem:[#allocation5 + $0x138] sm:$0xff]
    %v98 = vld [vmem:[#allocation5 + $0x140] sm:$0xff]
    %v99 = vld [vmem:[#allocation5 + $0x148] sm:$0xff]
    %v100 = vld [vmem:[#allocation5 + $0x150] sm:$0xff]
    %v101 = vld [vmem:[#allocation5 + $0x158] sm:$0xff]
    %v102 = vld [vmem:[#allocation5 + $0x160] sm:$0xff]
    %v103 = vld [vmem:[#allocation5 + $0x168] sm:$0xff]
    %v104 = vld [vmem:[#allocation5 + $0x170] sm:$0xff]
    %v105 = vld [vmem:[#allocation5 + $0x178] sm:$0xff]
    %v106 = vld [vmem:[#allocation5 + $0x180] sm:$0xff]
    %v107 = vld [vmem:[#allocation5 + $0x188] sm:$0xff]
    %v108 = vld [vmem:[#allocation5 + $0x190] sm:$0xff]
    %v109 = vld [vmem:[#allocation5 + $0x198] sm:$0xff]
    %v110 = vld [vmem:[#allocation5 + $0x1a0] sm:$0xff]
    %v111 = vld [vmem:[#allocation5 + $0x1a8] sm:$0xff]
    %v112 = vld [vmem:[#allocation5 + $0x1b0] sm:$0xff]
    %v113 = vld [vmem:[#allocation5 + $0x1b8] sm:$0xff]
    %v114 = vld [vmem:[#allocation5 + $0x1c0] sm:$0xff]
    %v115 = vld [vmem:[#allocation5 + $0x1c8] sm:$0xff]
    %v116 = vld [vmem:[#allocation5 + $0x1d0] sm:$0xff]
    %v117 = vld [vmem:[#allocation5 + $0x1d8] sm:$0xff]
    %v118 = vld [vmem:[#allocation5 + $0x1e0] sm:$0xff]
    %v119 = vld [vmem:[#allocation5 + $0x1e8] sm:$0xff]
    %v120 = vld [vmem:[#allocation5 + $0x1f0] sm:$0xff]
    %v121 = vld [vmem:[#allocation5 + $0x1f8] sm:$0xff]
    %v122 = vld [vmem:[#allocation5 + $0x200] sm:$0xff]
    %v123 = vld [vmem:[#allocation5 + $0x208] sm:$0xff]
    %v124 = vld [vmem:[#allocation5 + $0x210] sm:$0xff]
    %v125 = vld [vmem:[#allocation5 + $0x218] sm:$0xff]
    %v126 = vld [vmem:[#allocation5 + $0x220] sm:$0xff]
    %v127 = vld [vmem:[#allocation5 + $0x228] sm:$0xff]
    %v128 = vld [vmem:[#allocation5 + $0x230] sm:$0xff]
    %v129 = vld [vmem:[#allocation5 + $0x238] sm:$0xff]
    %v130 = vld [vmem:[#allocation5 + $0x240] sm:$0xff]
    %v131 = vld [vmem:[#allocation5 + $0x248] sm:$0xff]
    %v132 = vld [vmem:[#allocation5 + $0x250] sm:$0xff]
    %v133 = vld [vmem:[#allocation5 + $0x258] sm:$0xff]
    %v134 = vld [vmem:[#allocation5 + $0x260] sm:$0xff]
    %v135 = vld [vmem:[#allocation5 + $0x268] sm:$0xff]
    %v136 = vld [vmem:[#allocation5 + $0x270] sm:$0xff]
    %v137 = vld [vmem:[#allocation5 + $0x278] sm:$0xff]
    %v138 = vld [vmem:[#allocation5 + $0x280] sm:$0xff]
    %v139 = vld [vmem:[#allocation5 + $0x288] sm:$0xff]
    %v140 = vld [vmem:[#allocation5 + $0x290] sm:$0xff]
    %v141 = vld [vmem:[#allocation5 + $0x298] sm:$0xff]
    %v142 = vld [vmem:[#allocation5 + $0x2a0] sm:$0xff]
    %v143 = vld [vmem:[#allocation5 + $0x2a8] sm:$0xff]
    %v144 = vld [vmem:[#allocation5 + $0x2b0] sm:$0xff]
    %v145 = vld [vmem:[#allocation5 + $0x2b8] sm:$0xff]
    %v146 = vld [vmem:[#allocation5 + $0x2c0] sm:$0xff]
    %v147 = vld [vmem:[#allocation5 + $0x2c8] sm:$0xff]
    %v148 = vld [vmem:[#allocation5 + $0x2d0] sm:$0xff]
    %v149 = vld [vmem:[#allocation5 + $0x2d8] sm:$0xff]
    %v150 = vld [vmem:[#allocation5 + $0x2e0] sm:$0xff]
    %v151 = vld [vmem:[#allocation5 + $0x2e8] sm:$0xff]
    %v152 = vld [vmem:[#allocation5 + $0x2f0] sm:$0xff]
    %v153 = vld [vmem:[#allocation5 + $0x2f8] sm:$0xff]
    %v154 = vld [vmem:[#allocation5 + $0x300] sm:$0xff]
    %v155 = vld [vmem:[#allocation5 + $0x308] sm:$0xff]
    %v156 = vld [vmem:[#allocation5 + $0x310] sm:$0x1]
    %v158 = vlaneseq
    %v159 = vshrl.u32 %v158, 7
    %v160 = vsub.s32 0, %v159
    %v161 = vrot.slane %v57, %v160
    %v162 = vlaneseq
    %v163 = vshrl.u32 %v162, 7
    %v164 = vsub.s32 1, %v163
    %v165 = vrot.slane %v57, %v164
    %v166 = vlaneseq
    %v167 = vshrl.u32 %v166, 7
    %v168 = vsub.s32 2, %v167
    %v169 = vrot.slane %v57, %v168
    %v170 = vlaneseq
    %v171 = vshrl.u32 %v170, 7
    %v172 = vsub.s32 3, %v171
    %v173 = vrot.slane %v57, %v172
    %v174 = vlaneseq
    %v175 = vshrl.u32 %v174, 7
    %v176 = vsub.s32 4, %v175
    %v177 = vrot.slane %v57, %v176
    %v178 = vlaneseq
    %v179 = vshrl.u32 %v178, 7
    %v180 = vsub.s32 5, %v179
    %v181 = vrot.slane %v57, %v180
    %v182 = vlaneseq
    %v183 = vshrl.u32 %v182, 7
    %v184 = vsub.s32 6, %v183
    %v185 = vrot.slane %v57, %v184
    %vm192 = vcmask 138240
    %v193 = vsel %vm192, %v185, 0
    %vm195 = vcmask 1040384
    %v197 = vsel %vm195, %v156, 0
    %199 = vmatprep.subr.mxu0 0.0
    %200 = vmatpush1.msra.mxu0 %v58
    %201 = vmatprep.subr.mxu0 0.0
    %202 = vmatpush1.msra.mxu0 %v59
    %203 = vmatprep.subr.mxu0 0.0
    %204 = vmatpush1.msra.mxu0 %v60
    %205 = vmatprep.subr.mxu0 0.0
    %206 = vmatpush1.msra.mxu0 %v61
    %207 = vmatprep.subr.mxu0 0.0
    %208 = vmatpush1.msra.mxu0 %v62
    %209 = vmatprep.subr.mxu0 0.0
    %210 = vmatpush1.msra.mxu0 %v63
    %211 = vmatprep.subr.mxu0 0.0
    %212 = vmatpush1.msra.mxu0 %v64
    %213 = vmatprep.subr.mxu0 0.0
    %214 = vmatpush1.msra.mxu0 %v65
    %215 = vmatprep.subr.mxu0 0.0
    %216 = vmatpush1.msra.mxu0 %v66
    %217 = vmatprep.subr.mxu0 0.0
    %218 = vmatpush1.msra.mxu0 %v67
    %219 = vmatprep.subr.mxu0 0.0
    %220 = vmatpush1.msra.mxu0 %v68
    %221 = vmatprep.subr.mxu0 0.0
    %222 = vmatpush1.msra.mxu0 %v69
    %223 = vmatprep.subr.mxu0 0.0
    %224 = vmatpush1.msra.mxu0 %v70
    %225 = vmatprep.subr.mxu0 0.0
    %226 = vmatpush1.msra.mxu0 %v71
    %227 = vmatprep.subr.mxu0 0.0
    %228 = vmatpush1.msra.mxu0 %v72
    %229 = vmatprep.subr.mxu0 0.0
    %230 = vmatpush1.msra.mxu0 %v73
    %231 = vmatprep.subr.mxu0 0.0
    %232 = vmatpush1.msra.mxu0 %v74
    %233 = vmatprep.subr.mxu0 0.0
    %234 = vmatpush1.msra.mxu0 %v75
    %235 = vmatprep.subr.mxu0 0.0
    %236 = vmatpush1.msra.mxu0 %v76
    %237 = vmatprep.subr.mxu0 0.0
    %238 = vmatpush1.msra.mxu0 %v77
    %239 = vmatprep.subr.mxu0 0.0
    %240 = vmatpush1.msra.mxu0 %v78
    %241 = vmatprep.subr.mxu0 0.0
    %242 = vmatpush1.msra.mxu0 %v79
    %243 = vmatprep.subr.mxu0 0.0
    %244 = vmatpush1.msra.mxu0 %v80
    %245 = vmatprep.subr.mxu0 0.0
    %246 = vmatpush1.msra.mxu0 %v81
    %247 = vmatprep.subr.mxu0 0.0
    %248 = vmatpush1.msra.mxu0 %v82
    %249 = vmatprep.subr.mxu0 0.0
    %250 = vmatpush1.msra.mxu0 %v83
    %251 = vmatprep.subr.mxu0 0.0
    %252 = vmatpush1.msra.mxu0 %v84
    %253 = vmatprep.subr.mxu0 0.0
    %254 = vmatpush1.msra.mxu0 %v85
    %255 = vmatprep.subr.mxu0 0.0
    %256 = vmatpush1.msra.mxu0 %v86
    %257 = vmatprep.subr.mxu0 0.0
    %258 = vmatpush1.msra.mxu0 %v87
    %259 = vmatprep.subr.mxu0 0.0
    %260 = vmatpush1.msra.mxu0 %v88
    %261 = vmatprep.subr.mxu0 0.0
    %262 = vmatpush1.msra.mxu0 %v89
    %263 = vmatprep.mubr.f32.mxu0 %v165
    %264 = vmatmul.mubr.f32.gmra.mrb[0].mxu0 %v161
    %v265 = vpop.f32.mrb[0].mxu0
    %v266 = vadd.f32 0.0, %v265
    %v267 = vpop.f32.mrb[0].mxu0
    %268 = vdwg.mxu0
    %269 = vmatprep.subr.mxu0 0.0
    %270 = vmatpush1.msra.mxu0 %v90
    %271 = vmatprep.subr.mxu0 0.0
    %272 = vmatpush1.msra.mxu0 %v91
    %273 = vmatprep.subr.mxu0 0.0
    %274 = vmatpush1.msra.mxu0 %v92
    %275 = vmatprep.subr.mxu0 0.0
    %276 = vmatpush1.msra.mxu0 %v93
    %277 = vmatprep.subr.mxu0 0.0
    %278 = vmatpush1.msra.mxu0 %v94
    %279 = vmatprep.subr.mxu0 0.0
    %280 = vmatpush1.msra.mxu0 %v95
    %281 = vmatprep.subr.mxu0 0.0
    %282 = vmatpush1.msra.mxu0 %v96
    %283 = vmatprep.subr.mxu0 0.0
    %284 = vmatpush1.msra.mxu0 %v97
    %285 = vmatprep.subr.mxu0 0.0
    %286 = vmatpush1.msra.mxu0 %v98
    %287 = vmatprep.subr.mxu0 0.0
    %288 = vmatpush1.msra.mxu0 %v99
    %289 = vmatprep.subr.mxu0 0.0
    %290 = vmatpush1.msra.mxu0 %v100
    %291 = vmatprep.subr.mxu0 0.0
    %292 = vmatpush1.msra.mxu0 %v101
    %293 = vmatprep.subr.mxu0 0.0
    %294 = vmatpush1.msra.mxu0 %v102
    %295 = vmatprep.subr.mxu0 0.0
    %296 = vmatpush1.msra.mxu0 %v103
    %297 = vmatprep.subr.mxu0 0.0
    %298 = vmatpush1.msra.mxu0 %v104
    %299 = vmatprep.subr.mxu0 0.0
    %300 = vmatpush1.msra.mxu0 %v105
    %301 = vmatprep.subr.mxu0 0.0
    %302 = vmatpush1.msra.mxu0 %v106
    %303 = vmatprep.subr.mxu0 0.0
    %304 = vmatpush1.msra.mxu0 %v107
    %305 = vmatprep.subr.mxu0 0.0
    %306 = vmatpush1.msra.mxu0 %v108
    %307 = vmatprep.subr.mxu0 0.0
    %308 = vmatpush1.msra.mxu0 %v109
    %309 = vmatprep.subr.mxu0 0.0
    %310 = vmatpush1.msra.mxu0 %v110
    %311 = vmatprep.subr.mxu0 0.0
    %312 = vmatpush1.msra.mxu0 %v111
    %313 = vmatprep.subr.mxu0 0.0
    %314 = vmatpush1.msra.mxu0 %v112
    %315 = vmatprep.subr.mxu0 0.0
    %316 = vmatpush1.msra.mxu0 %v113
    %317 = vmatprep.subr.mxu0 0.0
    %318 = vmatpush1.msra.mxu0 %v114
    %319 = vmatprep.subr.mxu0 0.0
    %320 = vmatpush1.msra.mxu0 %v115
    %321 = vmatprep.subr.mxu0 0.0
    %322 = vmatpush1.msra.mxu0 %v116
    %323 = vmatprep.subr.mxu0 0.0
    %324 = vmatpush1.msra.mxu0 %v117
    %325 = vmatprep.subr.mxu0 0.0
    %326 = vmatpush1.msra.mxu0 %v118
    %327 = vmatprep.subr.mxu0 0.0
    %328 = vmatpush1.msra.mxu0 %v119
    %329 = vmatprep.subr.mxu0 0.0
    %330 = vmatpush1.msra.mxu0 %v120
    %331 = vmatprep.subr.mxu0 0.0
    %332 = vmatpush1.msra.mxu0 %v121
    %333 = vmatprep.mubr.f32.mxu0 %v173
    %334 = vmatmul.mubr.f32.gmra.mrb[0].mxu0 %v169
    %v335 = vpop.f32.mrb[0].mxu0
    %v336 = vadd.f32 %v266, %v335
    %v337 = vpop.f32.mrb[0].mxu0
    %338 = vdwg.mxu0
    %339 = vmatprep.subr.mxu0 0.0
    %340 = vmatpush1.msra.mxu0 %v122
    %341 = vmatprep.subr.mxu0 0.0
    %342 = vmatpush1.msra.mxu0 %v123
    %343 = vmatprep.subr.mxu0 0.0
    %344 = vmatpush1.msra.mxu0 %v124
    %345 = vmatprep.subr.mxu0 0.0
    %346 = vmatpush1.msra.mxu0 %v125
    %347 = vmatprep.subr.mxu0 0.0
    %348 = vmatpush1.msra.mxu0 %v126
    %349 = vmatprep.subr.mxu0 0.0
    %350 = vmatpush1.msra.mxu0 %v127
    %351 = vmatprep.subr.mxu0 0.0
    %352 = vmatpush1.msra.mxu0 %v128
    %353 = vmatprep.subr.mxu0 0.0
    %354 = vmatpush1.msra.mxu0 %v129
    %355 = vmatprep.subr.mxu0 0.0
    %356 = vmatpush1.msra.mxu0 %v130
    %357 = vmatprep.subr.mxu0 0.0
    %358 = vmatpush1.msra.mxu0 %v131
    %359 = vmatprep.subr.mxu0 0.0
    %360 = vmatpush1.msra.mxu0 %v132
    %361 = vmatprep.subr.mxu0 0.0
    %362 = vmatpush1.msra.mxu0 %v133
    %363 = vmatprep.subr.mxu0 0.0
    %364 = vmatpush1.msra.mxu0 %v134
    %365 = vmatprep.subr.mxu0 0.0
    %366 = vmatpush1.msra.mxu0 %v135
    %367 = vmatprep.subr.mxu0 0.0
    %368 = vmatpush1.msra.mxu0 %v136
    %369 = vmatprep.subr.mxu0 0.0
    %370 = vmatpush1.msra.mxu0 %v137
    %371 = vmatprep.subr.mxu0 0.0
    %372 = vmatpush1.msra.mxu0 %v138
    %373 = vmatprep.subr.mxu0 0.0
    %374 = vmatpush1.msra.mxu0 %v139
    %375 = vmatprep.subr.mxu0 0.0
    %376 = vmatpush1.msra.mxu0 %v140
    %377 = vmatprep.subr.mxu0 0.0
    %378 = vmatpush1.msra.mxu0 %v141
    %379 = vmatprep.subr.mxu0 0.0
    %380 = vmatpush1.msra.mxu0 %v142
    %381 = vmatprep.subr.mxu0 0.0
    %382 = vmatpush1.msra.mxu0 %v143
    %383 = vmatprep.subr.mxu0 0.0
    %384 = vmatpush1.msra.mxu0 %v144
    %385 = vmatprep.subr.mxu0 0.0
    %386 = vmatpush1.msra.mxu0 %v145
    %387 = vmatprep.subr.mxu0 0.0
    %388 = vmatpush1.msra.mxu0 %v146
    %389 = vmatprep.subr.mxu0 0.0
    %390 = vmatpush1.msra.mxu0 %v147
    %391 = vmatprep.subr.mxu0 0.0
    %392 = vmatpush1.msra.mxu0 %v148
    %393 = vmatprep.subr.mxu0 0.0
    %394 = vmatpush1.msra.mxu0 %v149
    %395 = vmatprep.subr.mxu0 0.0
    %396 = vmatpush1.msra.mxu0 %v150
    %397 = vmatprep.subr.mxu0 0.0
    %398 = vmatpush1.msra.mxu0 %v151
    %399 = vmatprep.subr.mxu0 0.0
    %400 = vmatpush1.msra.mxu0 %v152
    %401 = vmatprep.subr.mxu0 0.0
    %402 = vmatpush1.msra.mxu0 %v153
    %403 = vmatprep.mubr.f32.mxu0 %v181
    %404 = vmatmul.mubr.f32.gmra.mrb[0].mxu0 %v177
    %v405 = vpop.f32.mrb[0].mxu0
    %v406 = vadd.f32 %v336, %v405
    %v407 = vpop.f32.mrb[0].mxu0
    %408 = vdwg.mxu0
    %409 = vmatprep.subr.mxu0 0.0
    %410 = vmatpush1.msra.mxu0 %v154
    %411 = vmatprep.subr.mxu0 0.0
    %412 = vmatpush1.msra.mxu0 %v155
    %413 = vmatprep.subr.mxu0 0.0
    %414 = vmatpush1.msra.mxu0 %v197
    %415 = vmatprep.subr.mxu0 0.0
    %416 = vmatpush1.msra.mxu0 0.0
    %417 = vmatprep.subr.mxu0 0.0
    %418 = vmatpush1.msra.mxu0 0.0
    %419 = vmatprep.subr.mxu0 0.0
    %420 = vmatpush1.msra.mxu0 0.0
    %421 = vmatprep.subr.mxu0 0.0
    %422 = vmatpush1.msra.mxu0 0.0
    %423 = vmatprep.subr.mxu0 0.0
    %424 = vmatpush1.msra.mxu0 0.0
    %425 = vmatprep.subr.mxu0 0.0
    %426 = vmatpush1.msra.mxu0 0.0
    %427 = vmatprep.subr.mxu0 0.0
    %428 = vmatpush1.msra.mxu0 0.0
    %429 = vmatprep.subr.mxu0 0.0
    %430 = vmatpush1.msra.mxu0 0.0
    %431 = vmatprep.subr.mxu0 0.0
    %432 = vmatpush1.msra.mxu0 0.0
    %433 = vmatprep.subr.mxu0 0.0
    %434 = vmatpush1.msra.mxu0 0.0
    %435 = vmatprep.subr.mxu0 0.0
    %436 = vmatpush1.msra.mxu0 0.0
    %437 = vmatprep.subr.mxu0 0.0
    %438 = vmatpush1.msra.mxu0 0.0
    %439 = vmatprep.subr.mxu0 0.0
    %440 = vmatpush1.msra.mxu0 0.0
    %441 = vmatprep.subr.mxu0 0.0
    %442 = vmatpush1.msra.mxu0 0.0
    %443 = vmatprep.subr.mxu0 0.0
    %444 = vmatpush1.msra.mxu0 0.0
    %445 = vmatprep.subr.mxu0 0.0
    %446 = vmatpush1.msra.mxu0 0.0
    %447 = vmatprep.subr.mxu0 0.0
    %448 = vmatpush1.msra.mxu0 0.0
    %449 = vmatprep.subr.mxu0 0.0
    %450 = vmatpush1.msra.mxu0 0.0
    %451 = vmatprep.subr.mxu0 0.0
    %452 = vmatpush1.msra.mxu0 0.0
    %453 = vmatprep.subr.mxu0 0.0
    %454 = vmatpush1.msra.mxu0 0.0
    %455 = vmatprep.subr.mxu0 0.0
    %456 = vmatpush1.msra.mxu0 0.0
    %457 = vmatprep.subr.mxu0 0.0
    %458 = vmatpush1.msra.mxu0 0.0
    %459 = vmatprep.subr.mxu0 0.0
    %460 = vmatpush1.msra.mxu0 0.0
    %461 = vmatprep.subr.mxu0 0.0
    %462 = vmatpush1.msra.mxu0 0.0
    %463 = vmatprep.subr.mxu0 0.0
    %464 = vmatpush1.msra.mxu0 0.0
    %465 = vmatprep.subr.mxu0 0.0
    %466 = vmatpush1.msra.mxu0 0.0
    %467 = vmatprep.subr.mxu0 0.0
    %468 = vmatpush1.msra.mxu0 0.0
    %469 = vmatprep.subr.mxu0 0.0
    %470 = vmatpush1.msra.mxu0 0.0
    %471 = vmatprep.subr.mxu0 0.0
    %472 = vmatpush1.msra.mxu0 0.0
    %473 = vmatprep.mubr.f32.mxu0 0.0
    %474 = vmatmul.mubr.f32.gmra.mrb[0].mxu0 %v193
    %v475 = vpop.f32.mrb[0].mxu0
    %v476 = vadd.f32 %v406, %v475
    %v477 = vpop.f32.mrb[0].mxu0
    %478 = vdwg.mxu0
    %v479 = vmax.f32 %v476, 0.0
    %v480 = vld [vmem:[#allocation7] sm:$0xff]
    %v481 = vld [vmem:[#allocation7 + $0x8] sm:$0xff]
    %v482 = vld [vmem:[#allocation7 + $0x10] sm:$0xff]
    %v483 = vld [vmem:[#allocation7 + $0x18] sm:$0xff]
    %v484 = vld [vmem:[#allocation7 + $0x20] sm:$0xff]
    %v485 = vld [vmem:[#allocation7 + $0x28] sm:$0xff]
    %v486 = vld [vmem:[#allocation7 + $0x30] sm:$0xff]
    %v487 = vld [vmem:[#allocation7 + $0x38] sm:$0xff]
    %v488 = vld [vmem:[#allocation7 + $0x40] sm:$0xff]
    %v489 = vld [vmem:[#allocation7 + $0x48] sm:$0xff]
    %v490 = vld [vmem:[#allocation7 + $0x50] sm:$0xff]
    %v491 = vld [vmem:[#allocation7 + $0x58] sm:$0xff]
    %v492 = vld [vmem:[#allocation7 + $0x60] sm:$0xff]
    %v493 = vld [vmem:[#allocation7 + $0x68] sm:$0xff]
    %v494 = vld [vmem:[#allocation7 + $0x70] sm:$0xff]
    %v495 = vld [vmem:[#allocation7 + $0x78] sm:$0xff]
    %496 = vmatprep.subr.mxu0 0.0
    %497 = vmatpush1.msra.mxu0 %v480
    %498 = vmatprep.subr.mxu0 0.0
    %499 = vmatpush1.msra.mxu0 %v481
    %500 = vmatprep.subr.mxu0 0.0
    %501 = vmatpush1.msra.mxu0 %v482
    %502 = vmatprep.subr.mxu0 0.0
    %503 = vmatpush1.msra.mxu0 %v483
    %504 = vmatprep.subr.mxu0 0.0
    %505 = vmatpush1.msra.mxu0 %v484
    %506 = vmatprep.subr.mxu0 0.0
    %507 = vmatpush1.msra.mxu0 %v485
    %508 = vmatprep.subr.mxu0 0.0
    %509 = vmatpush1.msra.mxu0 %v486
    %510 = vmatprep.subr.mxu0 0.0
    %511 = vmatpush1.msra.mxu0 %v487
    %512 = vmatprep.subr.mxu0 0.0
    %513 = vmatpush1.msra.mxu0 %v488
    %514 = vmatprep.subr.mxu0 0.0
    %515 = vmatpush1.msra.mxu0 %v489
    %516 = vmatprep.subr.mxu0 0.0
    %517 = vmatpush1.msra.mxu0 %v490
    %518 = vmatprep.subr.mxu0 0.0
    %519 = vmatpush1.msra.mxu0 %v491
    %520 = vmatprep.subr.mxu0 0.0
    %521 = vmatpush1.msra.mxu0 %v492
    %522 = vmatprep.subr.mxu0 0.0
    %523 = vmatpush1.msra.mxu0 %v493
    %524 = vmatprep.subr.mxu0 0.0
    %525 = vmatpush1.msra.mxu0 %v494
    %526 = vmatprep.subr.mxu0 0.0
    %527 = vmatpush1.msra.mxu0 %v495
    %528 = vmatprep.subr.mxu0 0.0
    %529 = vmatpush1.msra.mxu0 0.0
    %530 = vmatprep.subr.mxu0 0.0
    %531 = vmatpush1.msra.mxu0 0.0
    %532 = vmatprep.subr.mxu0 0.0
    %533 = vmatpush1.msra.mxu0 0.0
    %534 = vmatprep.subr.mxu0 0.0
    %535 = vmatpush1.msra.mxu0 0.0
    %536 = vmatprep.subr.mxu0 0.0
    %537 = vmatpush1.msra.mxu0 0.0
    %538 = vmatprep.subr.mxu0 0.0
    %539 = vmatpush1.msra.mxu0 0.0
    %540 = vmatprep.subr.mxu0 0.0
    %541 = vmatpush1.msra.mxu0 0.0
    %542 = vmatprep.subr.mxu0 0.0
    %543 = vmatpush1.msra.mxu0 0.0
    %544 = vmatprep.subr.mxu0 0.0
    %545 = vmatpush1.msra.mxu0 0.0
    %546 = vmatprep.subr.mxu0 0.0
    %547 = vmatpush1.msra.mxu0 0.0
    %548 = vmatprep.subr.mxu0 0.0
    %549 = vmatpush1.msra.mxu0 0.0
    %550 = vmatprep.subr.mxu0 0.0
    %551 = vmatpush1.msra.mxu0 0.0
    %552 = vmatprep.subr.mxu0 0.0
    %553 = vmatpush1.msra.mxu0 0.0
    %554 = vmatprep.subr.mxu0 0.0
    %555 = vmatpush1.msra.mxu0 0.0
    %556 = vmatprep.subr.mxu0 0.0
    %557 = vmatpush1.msra.mxu0 0.0
    %558 = vmatprep.subr.mxu0 0.0
    %559 = vmatpush1.msra.mxu0 0.0
    %560 = vmatprep.mubr.f32.mxu0 0.0
    %561 = vmatmul.mubr.f32.gmra.mrb[0].mxu0 %v479
    %v562 = vpop.f32.mrb[0].mxu0
    %v563 = vadd.f32 0.0, %v562
    %v564 = vpop.f32.mrb[0].mxu0
    %565 = vdwg.mxu0
    %v566 = vcombine.low %v161, %v165
    %v567 = vcombine.low %v169, %v173
    %v569 = vunpack.c.l.s4 1983009808
    %v570 = vunpack.c.0.s8 %v569
    %v571 = vlaneseq
    %v572 = vshrl.u32 %v571, 7
    %v573 = vsub.s32 %v570, %v572
    %v574 = vrot.slane %v566, %v573
    %v576 = vunpack.c.l.s4 1983009808
    %v577 = vunpack.c.0.s8 %v576
    %v578 = vlaneseq
    %v579 = vshrl.u32 %v578, 7
    %v580 = vsub.s32 %v577, %v579
    %v581 = vrot.slane %v567, %v580
    %v582 = vcombine.low %v574, %v581
    %v583 = vcombine.low %v177, %v181
    %v585 = vunpack.c.l.s4 1983009808
    %v586 = vunpack.c.0.s8 %v585
    %v587 = vlaneseq
    %v588 = vshrl.u32 %v587, 7
    %v589 = vsub.s32 %v586, %v588
    %v590 = vrot.slane %v583, %v589
    %v592 = vunpack.c.l.s4 1983009808
    %v593 = vunpack.c.0.s8 %v592
    %v594 = vlaneseq
    %v595 = vshrl.u32 %v594, 7
    %v596 = vsub.s32 %v593, %v595
    %v597 = vrot.slane %v185, %v596
    %v598 = vcombine.low %v590, %v597
    %601 = vst [vmem:[#allocation8] sm:$0xff] %v582
    %vm602 = vcmask 1041408
    %vm603 = vcmask 1043458
    %vm604 = vmor %vm603, %vm602
    %vm605 = vcmask 128004
    %vm606 = vmor %vm605, %vm604
    %607 = vst.msk [vmem:[#allocation8 + $0x8] sm:$0x3f] %vm606, %v598
    %v608 = vlaneseq
    %v609 = vshrl.u32 %v608, 7
    %v610 = vsub.s32 0, %v609
    %v611 = vrot.slane %v563, %v610
    %612 = vst [vmem:[#allocation9] sm:$0x3] %v611
    // Predicated region
    $region26: #{tpu_custom_call.1} parent=1 // pred_check
      _
    $region27: #{tpu_custom_call.1} parent=1 // pred_check_branch
      %614 = sbr.rel (0) target = $region29
    $region28: #{tpu_custom_call.1} parent=1 // pred_region
      %s616 = ssub.s32 224, 224
      %617 = vsyncadd [#allocation4], %s616
      %s619 = sshll.u32 [#allocation8], 4
      %s620 = int_to_ptr.vmem [resolvable:$true] %s619
      %622 = dma.vmem_to_hbm [thread:$0]  %s620, 224, %s3, [#allocation4]
    $region29: #{tpu_custom_call.1} parent=1 // pred_fallthru
      _
    // Predicated region
    $region30: #{tpu_custom_call.1} parent=1 // pred_check
      _
    $region31: #{tpu_custom_call.1} parent=1 // pred_check_branch
      %624 = sbr.rel (0) target = $region33
    $region32: #{tpu_custom_call.1} parent=1 // pred_region
      %s626 = ssub.s32 32, 32
      %627 = vsyncadd [#allocation10], %s626
      %s629 = sshll.u32 [#allocation9], 4
      %s630 = int_to_ptr.vmem [resolvable:$true] %s629
      %632 = dma.vmem_to_hbm [thread:$0]  %s630, 32, %s4, [#allocation10]
    $region33: #{tpu_custom_call.1} parent=1 // pred_fallthru
      _
    // Predicated region
    $region34: #{tpu_custom_call.1} parent=1 // pred_check
      _
    $region35: #{tpu_custom_call.1} parent=1 // pred_check_branch
      %634 = sbr.rel (0) target = $region37
    $region36: #{tpu_custom_call.1} parent=1 // pred_region
      %635 = dma.done [#allocation4], 224
    $region37: #{tpu_custom_call.1} parent=1 // pred_fallthru
      _
    // Predicated region
    $region38: #{tpu_custom_call.1} parent=1 // pred_check
      _
    $region39: #{tpu_custom_call.1} parent=1 // pred_check_branch
      %637 = sbr.rel (0) target = $region41
    $region40: #{tpu_custom_call.1} parent=1 // pred_region
      %638 = dma.done [#allocation10], 32
    $region41: #{tpu_custom_call.1} parent=1 // pred_fallthru
      _
    %639 = vsyncpa [#allocation3], 1
    %640 = vsyncpa [#allocation6], 1
    %641 = vsyncpa [#allocation4], 1
    %642 = vsyncpa [#allocation10], 1

</llo_original>
